<compile_context>
chip_gen: v5e
topology: v5e:2x2
jax: 0.10.0
libtpu: 0.0.40
codegen_flags: <defaults>
</compile_context>

<pallas_src>
import functools
import math

import jax
import jax.numpy as jnp
from jax import lax
from jax.experimental import pallas as pl
from jax.experimental.pallas import tpu as pltpu


def _round_up(x, m):
    return (x + m - 1) // m * m


def _vmem_capacity_bytes():
    """Physical VMEM of the local chip; conservative fallback (v7x) if unknown."""
    try:
        cap = int(pltpu.get_tpu_info().vmem_capacity_bytes)
        if cap > 0:
            return cap
    except Exception:
        pass
    return 64 * 1024 * 1024


def _choose_tiling(B, Q, K, Dq, Dk, H, in_bytes, out_bytes, budget):
    """Pick (Bb, tq, Q_pad): batch block, query tile, padded query length."""
    # Layout-padded dims for the VMEM footprint estimate only (the last two dims
    # of every VMEM buffer are rounded up to (8, 128) tiles).
    Kc = _round_up(max(K, 1), 128)
    Dqc = _round_up(max(Dq, 1), 128)
    Dkc = _round_up(max(Dk, 1), 128)
    Hc = _round_up(max(H, 1), 128)
    Kr = _round_up(max(K, 1), 8)

    def fits(Bb, tq):
        tqc = _round_up(tq, 8)
        est = (2 * Bb * tqc * Dqc * in_bytes       # queries block (x2 pipeline bufs)
               + 2 * Bb * Kr * Dkc * in_bytes      # keys block    (x2 pipeline bufs)
               + 2 * Bb * tqc * Kc * out_bytes     # output block  (x2 pipeline bufs)
               + Bb * Kr * Hc * in_bytes           # kp scratch (single buffer)
               + 2 * (Dqc + Dkc) * Hc * in_bytes   # weight blocks
               + 4 * Hc * 4                        # bias blocks
               + 3 * Bb * tqc * Kc * 4             # f32 temporaries (scores/exp/probs)
               + 2 * Bb * tqc * Hc * 4)            # projected-query temporaries
        return est <= budget

    # ---- query tile: as large as the budget allows (fills the MXU M dim) ----
    q_pad = Q
    if Q <= 4096 and fits(1, Q):
        tq = Q                                     # full query axis, no padding
    else:
        t = max(8, (min(Q, 2048) // 8) * 8)
        while t > 8 and not fits(1, t):
            t -= 8
        t_fit = t
        # Prefer a multiple-of-8 divisor of Q (avoids host-side pad + out slice).
        t_div = 0
        td = t_fit
        while td >= 8:
            if Q % td == 0:
                t_div = td
                break
            td -= 8
        if t_div >= max(8, t_fit // 2):
            tq = t_div
        else:
            # TODO(synk): mask the ragged query tail in-kernel instead of padding.
            tq = t_fit
            q_pad = _round_up(Q, tq)

    # ---- batch block: a divisor of B, capped so the "parallel" batch axis ----
    # keeps >= 2 blocks (v7x has 2 TensorCores) and in-kernel reshapes stay
    # sublane-tile aligned.
    bb_cap = B if B < 2 else (B + 1) // 2
    row_target = max(256, min(2048, (4 << 20) // max(K * out_bytes, 1)))
    bb_cap = min(bb_cap, max(1, row_target // max(tq, 1)))
    align = 8 if in_bytes >= 4 else 16             # sublane packing (f32 / bf16)
    if (tq % align) or (K % align):
        bb_cap = 1                                 # keep leading-dim reshapes trivial
    Bb = 1
    for d in range(min(bb_cap, B), 1, -1):
        if B % d == 0 and fits(d, tq):
            Bb = d
            break
    return Bb, tq, q_pad


def _attention_scoring_kernel(q_ref, k_ref, wq_ref, bq_ref, wk_ref, bk_ref,
                              o_ref, kp_ref, *, approx):
    Bb, tq, Dq = q_ref.shape
    _, K, Dk = k_ref.shape
    H = wq_ref.shape[1]

    # Project keys once per batch block (first query tile only); reuse from VMEM
    # across all query tiles of this batch block.
    @pl.when(pl.program_id(1) == 0)
    def _():
        k2 = k_ref[...].reshape(Bb * K, Dk)
        kp = jnp.dot(k2, wk_ref[...], preferred_element_type=jnp.float32) + bk_ref[...]
        kp_ref[...] = kp.reshape(Bb, K, H).astype(kp_ref.dtype)

    # Stacked query projection fills the MXU M dimension (Bb*tq rows at once).
    q2 = q_ref[...].reshape(Bb * tq, Dq)
    qp = jnp.dot(q2, wq_ref[...], preferred_element_type=jnp.float32) + bq_ref[...]
    qp = qp.reshape(Bb, tq, H).astype(kp_ref.dtype)

    # (Bb, tq, H) x (Bb, K, H) -> (Bb, tq, K): contraction on H (canonical
    # flash-attention "trans_b" dimension numbers; no explicit kp transpose).
    scores = lax.dot_general(
        qp, kp_ref[...],
        dimension_numbers=(((2,), (2,)), ((0,), (0,))),
        preferred_element_type=jnp.float32,
    )

    # Numerically-stable softmax along the key axis, in f32; store in o_ref.dtype.
    m = jnp.max(scores, axis=-1, keepdims=True)
    e = jnp.exp(scores - m)
    denom = jnp.sum(e, axis=-1, keepdims=True)
    o_ref[...] = (e * pl.reciprocal(denom, approx=approx)).astype(o_ref.dtype)


def attention_scoring(queries, keys, w_q, b_q, w_k, b_k, *,
                      compute_dtype=jnp.bfloat16, out_dtype=None,
                      approx_reciprocal=None):
    """queries: (B,Q,Dq), keys: (B,K,Dk), w_q: (Dq,H), b_q: (H,)|(1,H), w_k: (Dk,H), b_k: (H,)|(1,H)."""
    B, Q, Dq = queries.shape
    Bk, K, Dk = keys.shape
    assert Bk == B, (Bk, B)
    H = w_q.shape[1]

    compute_dtype = jnp.dtype(compute_dtype)
    out_dtype = jnp.dtype(compute_dtype if out_dtype is None else out_dtype)
    if approx_reciprocal is None:
        # approx recip => softmax rows sum to 1 +/- ~1e-3; only used on the fast path.
        approx_reciprocal = compute_dtype == jnp.dtype(jnp.bfloat16)

    # Fold the 1/sqrt(H) attention scale into the query projection (free at runtime).
    inv = jnp.float32(1.0 / math.sqrt(H))
    wq32 = w_q.astype(jnp.float32) * inv
    bq32 = (b_q.astype(jnp.float32) * inv).reshape(1, H)
    wk32 = w_k.astype(jnp.float32)
    bk32 = b_k.astype(jnp.float32).reshape(1, H)

    in_bytes = compute_dtype.itemsize
    out_bytes = out_dtype.itemsize

    # Generation-aware VMEM budget: ~85% of physical (v5e/v6e: ~109 MiB of 128,
    # v7x: ~54 MiB of 64); tile selection uses 80% of that as headroom.
    vmem_cap = _vmem_capacity_bytes()
    vmem_limit = max(32 << 20, int(vmem_cap * 0.85))
    Bb, tq, Q_pad = _choose_tiling(B, Q, K, Dq, Dk, H, in_bytes, out_bytes,
                                   int(vmem_limit * 0.8))
    # TODO(synk): for extreme K (when even tq=8 blows the budget) add a K grid
    # axis with an online/two-pass softmax instead of relying on vmem_limit.

    qx = queries.astype(compute_dtype)
    kx = keys.astype(compute_dtype)
    wqx = wq32.astype(compute_dtype)
    wkx = wk32.astype(compute_dtype)
    if Q_pad != Q:
        qx = jnp.pad(qx, ((0, 0), (0, Q_pad - Q), (0, 0)))

    nb, nq = B // Bb, Q_pad // tq

    kernel = functools.partial(_attention_scoring_kernel, approx=approx_reciprocal)

    out = pl.pallas_call(
        kernel,
        out_shape=jax.ShapeDtypeStruct((B, Q_pad, K), out_dtype),
        grid_spec=pltpu.PrefetchScalarGridSpec(
            num_scalar_prefetch=0,
            grid=(nb, nq),
            in_specs=[
                pl.BlockSpec((Bb, tq, Dq), lambda b, qi: (b, qi, 0)),
                pl.BlockSpec((Bb, K, Dk), lambda b, qi: (b, 0, 0)),
                pl.BlockSpec((Dq, H), lambda b, qi: (0, 0)),
                pl.BlockSpec((1, H), lambda b, qi: (0, 0)),
                pl.BlockSpec((Dk, H), lambda b, qi: (0, 0)),
                pl.BlockSpec((1, H), lambda b, qi: (0, 0)),
            ],
            out_specs=pl.BlockSpec((Bb, tq, K), lambda b, qi: (b, qi, 0)),
            scratch_shapes=[pltpu.VMEM((Bb, K, H), compute_dtype)],
        ),
        compiler_params=pltpu.CompilerParams(
            dimension_semantics=("parallel", "arbitrary"),
            vmem_limit_bytes=int(vmem_limit),
        ),
    )(qx, kx, wqx, bq32, wkx, bk32)

    if Q_pad != Q:
        out = out[:, :Q, :]
    return out


def _reference(queries, keys, w_q, b_q, w_k, b_k):
    qp = jnp.einsum("bqd,dh->bqh", queries, w_q) + b_q.reshape(1, 1, -1)
    kp = jnp.einsum("bkd,dh->bkh", keys, w_k) + b_k.reshape(1, 1, -1)
    scores = jnp.einsum("bqh,bkh->bqk", qp, kp) / math.sqrt(w_q.shape[1])
    return jax.nn.softmax(scores, axis=-1)


if __name__ == "__main__":
    # Small shapes consistent with the module's forward.
    B, Q, K = 2, 8, 8
    query_size, key_size, num_hiddens = 16, 16, 32

    key = jax.random.PRNGKey(0)
    k0, k1, k2, k3, k4, k5 = jax.random.split(key, 6)

    queries = jax.random.normal(k0, (B, Q, query_size), dtype=jnp.float32)
    keys = jax.random.normal(k1, (B, K, key_size), dtype=jnp.float32)

    # Deterministic parameter init (same shapes as nn.Linear, stored transposed: (in, out)).
    bound_q = 1.0 / math.sqrt(query_size)
    bound_k = 1.0 / math.sqrt(key_size)
    w_q = jax.random.uniform(k2, (query_size, num_hiddens), minval=-bound_q, maxval=bound_q)
    b_q = jax.random.uniform(k3, (1, num_hiddens), minval=-bound_q, maxval=bound_q)
    w_k = jax.random.uniform(k4, (key_size, num_hiddens), minval=-bound_k, maxval=bound_k)
    b_k = jax.random.uniform(k5, (1, num_hiddens), minval=-bound_k, maxval=bound_k)

    ref = _reference(queries, keys, w_q, b_q, w_k, b_k)

    # Fast path: bf16 MXU operands, f32 softmax math, bf16 output (halved writeback).
    out_bf16 = attention_scoring(queries, keys, w_q, b_q, w_k, b_k,
                                 compute_dtype=jnp.bfloat16)
    out_bf16 = jax.block_until_ready(out_bf16)
    assert out_bf16.shape == (B, Q, K), out_bf16.shape
    assert out_bf16.dtype == jnp.bfloat16, out_bf16.dtype
    assert jnp.allclose(out_bf16.astype(jnp.float32), ref, atol=3e-2, rtol=3e-2), \
        "bf16 path mismatch vs reference"

    # Strict f32 path (validation only; f32 MXU matmuls are emulated multi-pass).
    out_f32 = attention_scoring(queries, keys, w_q, b_q, w_k, b_k,
                                compute_dtype=jnp.float32)
    out_f32 = jax.block_until_ready(out_f32)
    assert out_f32.dtype == jnp.float32
    assert jnp.allclose(out_f32, ref, atol=1e-4, rtol=1e-4), "f32 path mismatch vs reference"

    print("KERNEL_OK")
</pallas_src>

<mosaic_0001>
module attributes {stable_mosaic.version = 11 : i64} {
  func.func @_attention_scoring_kernel(%arg0: i32, %arg1: i32, %arg2: memref<1x8x16xbf16, #tpu.memory_space<vmem>>, %arg3: memref<1x8x16xbf16, #tpu.memory_space<vmem>>, %arg4: memref<16x32xbf16, #tpu.memory_space<vmem>>, %arg5: memref<1x32xf32, #tpu.memory_space<vmem>>, %arg6: memref<16x32xbf16, #tpu.memory_space<vmem>>, %arg7: memref<1x32xf32, #tpu.memory_space<vmem>>, %arg8: memref<1x8x8xbf16, #tpu.memory_space<vmem>>, %arg9: memref<1x8x32xbf16, #tpu.memory_space<vmem>>) attributes {dimension_semantics = [#tpu.dimension_semantics<parallel>, #tpu.dimension_semantics<arbitrary>], iteration_bounds = array<i64: 2, 1>, scalar_prefetch = 0 : i64, scratch_operands = 1 : i64, tpu.core_type = #tpu.core_type<tc>, window_params = [{transform_indices = @transform_0, window_bounds = array<i64: 1, 8, 16>}, {transform_indices = @transform_1, window_bounds = array<i64: 1, 8, 16>}, {pipeline_mode = #tpu.pipeline_mode<synchronous>, transform_indices = @transform_2, window_bounds = array<i64: 16, 32>}, {pipeline_mode = #tpu.pipeline_mode<synchronous>, transform_indices = @transform_3, window_bounds = array<i64: 1, 32>}, {pipeline_mode = #tpu.pipeline_mode<synchronous>, transform_indices = @transform_4, window_bounds = array<i64: 16, 32>}, {pipeline_mode = #tpu.pipeline_mode<synchronous>, transform_indices = @transform_5, window_bounds = array<i64: 1, 32>}, {transform_indices = @transform_6, window_bounds = array<i64: 1, 8, 8>}]} {
    %c0_i32 = arith.constant 0 : i32
    %0 = arith.cmpi eq, %arg1, %c0_i32 : i32
    %1 = arith.extui %0 : i1 to i32
    %c0_i32_0 = arith.constant 0 : i32
    %2 = arith.cmpi ne, %1, %c0_i32_0 : i32
    scf.if %2 {
      %c0_16 = arith.constant 0 : index
      %c0_17 = arith.constant 0 : index
      %c0_18 = arith.constant 0 : index
      %26 = vector.load %arg3[%c0_16, %c0_17, %c0_18] : memref<1x8x16xbf16, #tpu.memory_space<vmem>>, vector<1x8x16xbf16>
      %27 = vector.shape_cast %26 : vector<1x8x16xbf16> to vector<8x16xbf16>
      %c0_19 = arith.constant 0 : index
      %c0_20 = arith.constant 0 : index
      %28 = vector.load %arg6[%c0_19, %c0_20] : memref<16x32xbf16, #tpu.memory_space<vmem>>, vector<16x32xbf16>
      %cst_21 = arith.constant dense<0.000000e+00> : vector<8x32xf32>
      %29 = tpu.matmul %27, %28, %cst_21 {dimension_numbers = #tpu.dot_dimension_numbers<[1], [0], [0], [1], [0, 0, 1, 1], [], []>} : vector<8x16xbf16>, vector<16x32xbf16>, vector<8x32xf32> -> vector<8x32xf32>
      %c0_22 = arith.constant 0 : index
      %c0_23 = arith.constant 0 : index
      %30 = vector.load %arg7[%c0_22, %c0_23] : memref<1x32xf32, #tpu.memory_space<vmem>>, vector<1x32xf32>
      %31 = vector.broadcast %30 : vector<1x32xf32> to vector<8x32xf32>
      %32 = arith.addf %29, %31 : vector<8x32xf32>
      %33 = vector.shape_cast %32 : vector<8x32xf32> to vector<1x8x32xf32>
      %34 = arith.truncf %33 : vector<1x8x32xf32> to vector<1x8x32xbf16>
      %c0_24 = arith.constant 0 : index
      %c0_25 = arith.constant 0 : index
      %c0_26 = arith.constant 0 : index
      %35 = vector.load %arg9[%c0_24, %c0_25, %c0_26] : memref<1x8x32xbf16, #tpu.memory_space<vmem>>, vector<1x8x32xbf16>
      tpu.vector_store %arg9[%c0_24, %c0_25, %c0_26], %34 {strides = array<i32>} : memref<1x8x32xbf16, #tpu.memory_space<vmem>>, vector<1x8x32xbf16>,
    } else {
    }
    %c0 = arith.constant 0 : index
    %c0_1 = arith.constant 0 : index
    %c0_2 = arith.constant 0 : index
    %3 = vector.load %arg2[%c0, %c0_1, %c0_2] : memref<1x8x16xbf16, #tpu.memory_space<vmem>>, vector<1x8x16xbf16>
    %4 = vector.shape_cast %3 : vector<1x8x16xbf16> to vector<8x16xbf16>
    %c0_3 = arith.constant 0 : index
    %c0_4 = arith.constant 0 : index
    %5 = vector.load %arg4[%c0_3, %c0_4] : memref<16x32xbf16, #tpu.memory_space<vmem>>, vector<16x32xbf16>
    %cst = arith.constant dense<0.000000e+00> : vector<8x32xf32>
    %6 = tpu.matmul %4, %5, %cst {dimension_numbers = #tpu.dot_dimension_numbers<[1], [0], [0], [1], [0, 0, 1, 1], [], []>} : vector<8x16xbf16>, vector<16x32xbf16>, vector<8x32xf32> -> vector<8x32xf32>
    %c0_5 = arith.constant 0 : index
    %c0_6 = arith.constant 0 : index
    %7 = vector.load %arg5[%c0_5, %c0_6] : memref<1x32xf32, #tpu.memory_space<vmem>>, vector<1x32xf32>
    %8 = vector.broadcast %7 : vector<1x32xf32> to vector<8x32xf32>
    %9 = arith.addf %6, %8 : vector<8x32xf32>
    %10 = vector.shape_cast %9 : vector<8x32xf32> to vector<1x8x32xf32>
    %11 = arith.truncf %10 : vector<1x8x32xf32> to vector<1x8x32xbf16>
    %c0_7 = arith.constant 0 : index
    %c0_8 = arith.constant 0 : index
    %c0_9 = arith.constant 0 : index
    %12 = vector.load %arg9[%c0_7, %c0_8, %c0_9] : memref<1x8x32xbf16, #tpu.memory_space<vmem>>, vector<1x8x32xbf16>
    %cst_10 = arith.constant dense<0.000000e+00> : vector<1x8x8xf32>
    %13 = tpu.matmul %11, %12, %cst_10 {dimension_numbers = #tpu.dot_dimension_numbers<[2], [2], [1], [1], [0, 0, 0, 1, 1, 1], [0], [0]>} : vector<1x8x32xbf16>, vector<1x8x32xbf16>, vector<1x8x8xf32> -> vector<1x8x8xf32>
    %cst_11 = arith.constant dense<0xFF800000> : vector<1x8xf32>
    %14 = vector.multi_reduction <maximumf>, %13, %cst_11 [2] : vector<1x8x8xf32> to vector<1x8xf32>
    %15 = vector.shape_cast %14 : vector<1x8xf32> to vector<1x8x1xf32>
    %16 = vector.broadcast %15 : vector<1x8x1xf32> to vector<1x8x8xf32>
    %17 = arith.subf %13, %16 : vector<1x8x8xf32>
    %18 = math.exp %17 : vector<1x8x8xf32>
    %cst_12 = arith.constant dense<0.000000e+00> : vector<1x8xf32>
    %19 = vector.multi_reduction <add>, %18, %cst_12 [2] : vector<1x8x8xf32> to vector<1x8xf32>
    %20 = vector.shape_cast %19 : vector<1x8xf32> to vector<1x8x1xf32>
    %21 = tpu.reciprocal %20 {approx = true} : vector<1x8x1xf32> -> vector<1x8x1xf32>
    %22 = vector.broadcast %21 : vector<1x8x1xf32> to vector<1x8x8xf32>
    %23 = arith.mulf %18, %22 : vector<1x8x8xf32>
    %24 = arith.truncf %23 : vector<1x8x8xf32> to vector<1x8x8xbf16>
    %c0_13 = arith.constant 0 : index
    %c0_14 = arith.constant 0 : index
    %c0_15 = arith.constant 0 : index
    %25 = vector.load %arg8[%c0_13, %c0_14, %c0_15] : memref<1x8x8xbf16, #tpu.memory_space<vmem>>, vector<1x8x8xbf16>
    tpu.vector_store %arg8[%c0_13, %c0_14, %c0_15], %24 {strides = array<i32>} : memref<1x8x8xbf16, #tpu.memory_space<vmem>>, vector<1x8x8xbf16>,
    return
  }
  func.func @transform_0(%arg0: i32, %arg1: i32) -> (i32, i32, i32) {
    %c0_i32 = arith.constant 0 : i32
    %c0_i32_0 = arith.constant 0 : i32
    return %arg0, %arg1, %c0_i32 : i32, i32, i32
  }
  func.func @transform_1(%arg0: i32, %arg1: i32) -> (i32, i32, i32) {
    %c0_i32 = arith.constant 0 : i32
    %c0_i32_0 = arith.constant 0 : i32
    %c0_i32_1 = arith.constant 0 : i32
    return %arg0, %c0_i32, %c0_i32_0 : i32, i32, i32
  }
  func.func @transform_2(%arg0: i32, %arg1: i32) -> (i32, i32) {
    %c0_i32 = arith.constant 0 : i32
    %c0_i32_0 = arith.constant 0 : i32
    %c0_i32_1 = arith.constant 0 : i32
    return %c0_i32, %c0_i32_0 : i32, i32
  }
  func.func @transform_3(%arg0: i32, %arg1: i32) -> (i32, i32) {
    %c0_i32 = arith.constant 0 : i32
    %c0_i32_0 = arith.constant 0 : i32
    %c0_i32_1 = arith.constant 0 : i32
    return %c0_i32, %c0_i32_0 : i32, i32
  }
  func.func @transform_4(%arg0: i32, %arg1: i32) -> (i32, i32) {
    %c0_i32 = arith.constant 0 : i32
    %c0_i32_0 = arith.constant 0 : i32
    %c0_i32_1 = arith.constant 0 : i32
    return %c0_i32, %c0_i32_0 : i32, i32
  }
  func.func @transform_5(%arg0: i32, %arg1: i32) -> (i32, i32) {
    %c0_i32 = arith.constant 0 : i32
    %c0_i32_0 = arith.constant 0 : i32
    %c0_i32_1 = arith.constant 0 : i32
    return %c0_i32, %c0_i32_0 : i32, i32
  }
  func.func @transform_6(%arg0: i32, %arg1: i32) -> (i32, i32, i32) {
    %c0_i32 = arith.constant 0 : i32
    %c0_i32_0 = arith.constant 0 : i32
    return %arg0, %arg1, %c0_i32 : i32, i32, i32
  }
}

</mosaic_0001>

<llo_original>
// kernel: tpu_custom_call.1
$region0: #{tpu_custom_call.1}
  #allocation0 [shape = 'u32[]', space=smem, size = 0x4, offset = 0x4, fixed_abs, tag = 'smem constant byte address 0x4 - core index']
  #allocation1 [shape = 'u32[72,128]{1,0:T(1,128)}', space=vmem, size = 0x9000, scoped, tag = 'internal scratch']
  #allocation2 [shape = 'bf16[1,8,32]{2,1,0:T(8,128)(2,1)}', space=vmem, size = 0x800, scoped, tag = 'scratch operand']
  %s0 = inlined_call_operand.hbm [shape: bf16[2,8,16], index: 0, kind: input, shape index: {}]
  %s1 = inlined_call_operand.hbm [shape: bf16[2,8,16], index: 1, kind: input, shape index: {}]
  %s2 = inlined_call_operand.hbm [shape: bf16[16,32], index: 2, kind: input, shape index: {}]
  %s3 = inlined_call_operand.vmem [shape: f32[1,32], index: 3, kind: input, shape index: {}]
  %s4 = inlined_call_operand.hbm [shape: bf16[16,32], index: 4, kind: input, shape index: {}]
  %s5 = inlined_call_operand.vmem [shape: f32[1,32], index: 5, kind: input, shape index: {}]
  %s6 = inlined_call_operand.hbm [shape: bf16[2,8,8], index: 6, kind: output, shape index: {}]
  %s7 = sld [smem:[#allocation0]]
  $region77: #{tpu_custom_call.1} parent=0
    _
  %s9 = ssub.s32 1, %s7
  %s10 = scalar_select 0, %s9, %s7
  $region1: #{tpu_custom_call.1} parent=0
    #allocation3 [shape = 'u8[4096]{0}', space=vmem, size = 0x1000, scoped, tag = 'input window, operand 0']
    #allocation4 [shape = 's32[2]{0}', space=sflag, size = 0x8, scoped, tag = 'scoped memory for tpu_custom_call.1']
    #allocation5 [shape = 's32[2]{0}', space=sflag, size = 0x8, scoped, tag = 'scoped memory for tpu_custom_call.1']
    #allocation6 [shape = 'u8[4096]{0}', space=vmem, size = 0x1000, scoped, tag = 'input window, operand 1']
    #allocation7 [shape = 's32[2]{0}', space=sflag, size = 0x8, scoped, tag = 'scoped memory for tpu_custom_call.1']
    #allocation8 [shape = 'u8[4096]{0}', space=vmem, size = 0x1000, scoped, tag = 'input window, operand 2, single buffered']
    #allocation9 [shape = 'u8[4096]{0}', space=vmem, size = 0x1000, scoped, tag = 'input window, operand 4, single buffered']
    #allocation10 [shape = 's32[1]{0}', space=sflag, size = 0x4, scoped, tag = 'scoped memory for tpu_custom_call.1']
    #allocation11 [shape = 'u8[4096]{0}', space=vmem, size = 0x1000, scoped, tag = 'output window, operand 0']
    %11 = vsyncpa [#allocation4], 0
    %s12 = scalar_lea.sflag [#allocation4], 1
    %13 = vsyncpa %s12, 0
    %14 = vsyncpa [#allocation7], 0
    %s15 = scalar_lea.sflag [#allocation7], 1
    %16 = vsyncpa %s15, 0
    %17 = vsyncpa [#allocation10], 0
    %18 = vsyncpa [#allocation5], 0
    %s19 = scalar_lea.sflag [#allocation5], 1
    %20 = vsyncpa %s19, 0
    loop: start=0, step=1, limit=4
    $region2: #{tpu_custom_call.1} parent=1 // loop_pre_header
      _
    $region3: #{tpu_custom_call.1} parent=1 // loop_header
      %s22 = sphi 0, %s26
      %p23 = scmp.ge.s32.totalorder %s22, 4
      %s29 = sphi 0, %s41
      %s30 = sphi 0, %s37
      %s31 = sphi 0, %s29
      %s32 = sphi 0, %s30
      %s33 = sphi 0, %s31
      %s34 = sphi 0, %s32
      %s46 = sphi 0, %s48
      %s49 = sphi 0, %s46
      %s50 = sphi 0, %s49
      %s66 = sphi 0, %s50
      %s72 = sphi 0, %s74
      %s75 = sphi 0, %s72
      %s76 = sphi 0, %s75
      %s92 = sphi 0, %s76
      %s96 = sphi 0, %s96
      %s98 = sphi 0, %s96
      %s99 = sphi 0, %s98
      %s113 = sphi 0, %s99
      %s117 = sphi 0, %s117
      %s119 = sphi 0, %s117
      %s120 = sphi 0, %s119
      %s134 = sphi 0, %s120
      %s138 = sphi 0, %s138
      %s140 = sphi 0, %s138
      %s141 = sphi 0, %s140
      %s155 = sphi 0, %s141
      %s159 = sphi 0, %s159
      %s161 = sphi 0, %s159
      %s162 = sphi 0, %s161
      %s176 = sphi 0, %s162
      %s184 = sphi 0, %s186
      %s187 = sphi 0, %s184
      %s188 = sphi 0, %s187
      %s204 = sphi 0, %s188
    $region4: #{tpu_custom_call.1} parent=1 // loop_header_branch
      %25 = sbr.rel (%p23) target = $region8
    $region5: #{tpu_custom_call.1} parent=1 // loop_body
      %s27 = ssub.s32 %s22, 1
      %s28 = ssub.s32 %s22, 2
      %s35 = sadd.s32 1, %s30
      %p36 = scmp.ge.s32.totalorder %s35, 1
      %s37 = scalar_select %p36, 0, %s35
      %s38 = sadd.s32 1, %s29
      %s39 = scalar_select %p36, %s38, %s29
      %p40 = scmp.ge.s32.totalorder %s39, 2
      %s41 = scalar_select %p40, 0, %s39
      %s42 = ssub.s32 %s29, %s41
      %s43 = ssub.s32 %s30, %s37
      %s44 = sor.u32 %s42, %s43
      %p45 = scmp.eq.s32.totalorder %s44, 0
      %s47 = sadd.s32 %s46, 1
      %s48 = scalar_select %p45, %s46, %s47
      %p51 = pneg %p45
      %p52 = scmp.eq.s32.totalorder %s22, 1
      %p53 = por %p51, %p52
      %p54 = scmp.ne.s32.totalorder %s46, %s49
      %p55 = scmp.eq.s32.totalorder %s22, 0
      %p56 = por %p54, %p55
      %p57 = scmp.ne.s32.totalorder %s46, %s49
      %p58 = scmp.eq.s32.totalorder %s27, 1
      %p59 = por %p57, %p58
      %p60 = scmp.ne.s32.totalorder %s49, %s50
      %p61 = scmp.eq.s32.totalorder %s27, 0
      %p62 = por %p60, %p61
      %p63 = scmp.ne.s32.totalorder %s49, %s50
      %p64 = scmp.eq.s32.totalorder %s28, 1
      %p65 = por %p63, %p64
      %p67 = scmp.ne.s32.totalorder %s50, %s66
      %p68 = scmp.eq.s32.totalorder %s28, 0
      %p69 = por %p67, %p68
      %s70 = ssub.s32 %s29, %s41
      %p71 = scmp.eq.s32.totalorder %s70, 0
      %s73 = sadd.s32 %s72, 1
      %s74 = scalar_select %p71, %s72, %s73
      %p77 = pneg %p71
      %p78 = scmp.eq.s32.totalorder %s22, 1
      %p79 = por %p77, %p78
      %p80 = scmp.ne.s32.totalorder %s72, %s75
      %p81 = scmp.eq.s32.totalorder %s22, 0
      %p82 = por %p80, %p81
      %p83 = scmp.ne.s32.totalorder %s72, %s75
      %p84 = scmp.eq.s32.totalorder %s27, 1
      %p85 = por %p83, %p84
      %p86 = scmp.ne.s32.totalorder %s75, %s76
      %p87 = scmp.eq.s32.totalorder %s27, 0
      %p88 = por %p86, %p87
      %p89 = scmp.ne.s32.totalorder %s75, %s76
      %p90 = scmp.eq.s32.totalorder %s28, 1
      %p91 = por %p89, %p90
      %p93 = scmp.ne.s32.totalorder %s76, %s92
      %p94 = scmp.eq.s32.totalorder %s28, 0
      %p95 = por %p93, %p94
      %s97 = sadd.s32 %s96, 1
      %p100 = scmp.eq.s32.totalorder %s22, 1
      %p101 = scmp.ne.s32.totalorder %s96, %s98
      %p102 = scmp.eq.s32.totalorder %s22, 0
      %p103 = por %p101, %p102
      %p104 = scmp.ne.s32.totalorder %s96, %s98
      %p105 = scmp.eq.s32.totalorder %s27, 1
      %p106 = por %p104, %p105
      %p107 = scmp.ne.s32.totalorder %s98, %s99
      %p108 = scmp.eq.s32.totalorder %s27, 0
      %p109 = por %p107, %p108
      %p110 = scmp.ne.s32.totalorder %s98, %s99
      %p111 = scmp.eq.s32.totalorder %s28, 1
      %p112 = por %p110, %p111
      %p114 = scmp.ne.s32.totalorder %s99, %s113
      %p115 = scmp.eq.s32.totalorder %s28, 0
      %p116 = por %p114, %p115
      %s118 = sadd.s32 %s117, 1
      %p121 = scmp.eq.s32.totalorder %s22, 1
      %p122 = scmp.ne.s32.totalorder %s117, %s119
      %p123 = scmp.eq.s32.totalorder %s22, 0
      %p124 = por %p122, %p123
      %p125 = scmp.ne.s32.totalorder %s117, %s119
      %p126 = scmp.eq.s32.totalorder %s27, 1
      %p127 = por %p125, %p126
      %p128 = scmp.ne.s32.totalorder %s119, %s120
      %p129 = scmp.eq.s32.totalorder %s27, 0
      %p130 = por %p128, %p129
      %p131 = scmp.ne.s32.totalorder %s119, %s120
      %p132 = scmp.eq.s32.totalorder %s28, 1
      %p133 = por %p131, %p132
      %p135 = scmp.ne.s32.totalorder %s120, %s134
      %p136 = scmp.eq.s32.totalorder %s28, 0
      %p137 = por %p135, %p136
      %s139 = sadd.s32 %s138, 1
      %p142 = scmp.eq.s32.totalorder %s22, 1
      %p143 = scmp.ne.s32.totalorder %s138, %s140
      %p144 = scmp.eq.s32.totalorder %s22, 0
      %p145 = por %p143, %p144
      %p146 = scmp.ne.s32.totalorder %s138, %s140
      %p147 = scmp.eq.s32.totalorder %s27, 1
      %p148 = por %p146, %p147
      %p149 = scmp.ne.s32.totalorder %s140, %s141
      %p150 = scmp.eq.s32.totalorder %s27, 0
      %p151 = por %p149, %p150
      %p152 = scmp.ne.s32.totalorder %s140, %s141
      %p153 = scmp.eq.s32.totalorder %s28, 1
      %p154 = por %p152, %p153
      %p156 = scmp.ne.s32.totalorder %s141, %s155
      %p157 = scmp.eq.s32.totalorder %s28, 0
      %p158 = por %p156, %p157
      %s160 = sadd.s32 %s159, 1
      %p163 = scmp.eq.s32.totalorder %s22, 1
      %p164 = scmp.ne.s32.totalorder %s159, %s161
      %p165 = scmp.eq.s32.totalorder %s22, 0
      %p166 = por %p164, %p165
      %p167 = scmp.ne.s32.totalorder %s159, %s161
      %p168 = scmp.eq.s32.totalorder %s27, 1
      %p169 = por %p167, %p168
      %p170 = scmp.ne.s32.totalorder %s161, %s162
      %p171 = scmp.eq.s32.totalorder %s27, 0
      %p172 = por %p170, %p171
      %p173 = scmp.ne.s32.totalorder %s161, %s162
      %p174 = scmp.eq.s32.totalorder %s28, 1
      %p175 = por %p173, %p174
      %p177 = scmp.ne.s32.totalorder %s162, %s176
      %p178 = scmp.eq.s32.totalorder %s28, 0
      %p179 = por %p177, %p178
      %s180 = ssub.s32 %s29, %s41
      %s181 = ssub.s32 %s30, %s37
      %s182 = sor.u32 %s180, %s181
      %p183 = scmp.eq.s32.totalorder %s182, 0
      %s185 = sadd.s32 %s184, 1
      %s186 = scalar_select %p183, %s184, %s185
      %p189 = pneg %p183
      %p190 = scmp.eq.s32.totalorder %s22, 1
      %p191 = por %p189, %p190
      %p192 = scmp.ne.s32.totalorder %s184, %s187
      %p193 = scmp.eq.s32.totalorder %s22, 0
      %p194 = por %p192, %p193
      %p195 = scmp.ne.s32.totalorder %s184, %s187
      %p196 = scmp.eq.s32.totalorder %s27, 1
      %p197 = por %p195, %p196
      %p198 = scmp.ne.s32.totalorder %s187, %s188
      %p199 = scmp.eq.s32.totalorder %s27, 0
      %p200 = por %p198, %p199
      %p201 = scmp.ne.s32.totalorder %s187, %s188
      %p202 = scmp.eq.s32.totalorder %s28, 1
      %p203 = por %p201, %p202
      %p205 = scmp.ne.s32.totalorder %s188, %s204
      %p206 = scmp.eq.s32.totalorder %s28, 0
      %p207 = por %p205, %p206
      %p208 = scmp.le.s32.totalorder 1, %s22
      %p209 = scmp.lt.s32.totalorder %s22, 3
      %p210 = pnand %p208, %p209
      %p211 = pneg %p210
      // Predicated region
      $region9: #{tpu_custom_call.1} parent=5 // pred_check
        _
      $region10: #{tpu_custom_call.1} parent=5 // pred_check_branch
        %213 = sbr.rel (%p210) target = $region12
      $region11: #{tpu_custom_call.1} parent=5 // pred_region
        %s214 = ssub.s32 %s22, 1
        // Predicated region
        $region13: #{tpu_custom_call.1} parent=11 // pred_check
          %p215 = pneg %p109
        $region14: #{tpu_custom_call.1} parent=11 // pred_check_branch
          %217 = sbr.rel (%p215) target = $region16
        $region15: #{tpu_custom_call.1} parent=11 // pred_region
          %219 = vsyncadd [#allocation7], 0
          %s220 = sshll.u32 %s2, 4
          %s221 = int_to_ptr.hbm [resolvable:$true] %s220
          %s222 = sshll.u32 [#allocation8], 4
          %s223 = int_to_ptr.vmem [resolvable:$true] %s222
          %228 = dma.hbm_to_vmem [thread:$0]  %s221, 128, %s223, [#allocation7], 64, 64, 4
        $region16: #{tpu_custom_call.1} parent=11 // pred_fallthru
          _
        // Predicated region
        $region17: #{tpu_custom_call.1} parent=11 // pred_check
          %p229 = pneg %p130
        $region18: #{tpu_custom_call.1} parent=11 // pred_check_branch
          %231 = sbr.rel (%p229) target = $region20
        $region19: #{tpu_custom_call.1} parent=11 // pred_region
          _
        $region20: #{tpu_custom_call.1} parent=11 // pred_fallthru
          _
        // Predicated region
        $region21: #{tpu_custom_call.1} parent=11 // pred_check
          %p232 = pneg %p151
        $region22: #{tpu_custom_call.1} parent=11 // pred_check_branch
          %234 = sbr.rel (%p232) target = $region24
        $region23: #{tpu_custom_call.1} parent=11 // pred_region
          %236 = vsyncadd [#allocation10], 0
          %s237 = sshll.u32 %s4, 4
          %s238 = int_to_ptr.hbm [resolvable:$true] %s237
          %s239 = sshll.u32 [#allocation9], 4
          %s240 = int_to_ptr.vmem [resolvable:$true] %s239
          %245 = dma.hbm_to_vmem [thread:$0]  %s238, 128, %s240, [#allocation10], 64, 64, 4
        $region24: #{tpu_custom_call.1} parent=11 // pred_fallthru
          _
        // Predicated region
        $region25: #{tpu_custom_call.1} parent=11 // pred_check
          %p246 = pneg %p172
        $region26: #{tpu_custom_call.1} parent=11 // pred_check_branch
          %248 = sbr.rel (%p246) target = $region28
        $region27: #{tpu_custom_call.1} parent=11 // pred_region
          _
        $region28: #{tpu_custom_call.1} parent=11 // pred_fallthru
          _
      $region12: #{tpu_custom_call.1} parent=5 // pred_fallthru
        _
      %p249 = scmp.lt.s32.totalorder %s22, 2
      // Predicated region
      $region29: #{tpu_custom_call.1} parent=5 // pred_check
        %p250 = pneg %p249
      $region30: #{tpu_custom_call.1} parent=5 // pred_check_branch
        %252 = sbr.rel (%p250) target = $region32
      $region31: #{tpu_custom_call.1} parent=5 // pred_region
        // Predicated region
        $region33: #{tpu_custom_call.1} parent=31 // pred_check
          %p253 = pneg %p56
        $region34: #{tpu_custom_call.1} parent=31 // pred_check_branch
          %255 = sbr.rel (%p253) target = $region36
        $region35: #{tpu_custom_call.1} parent=31 // pred_region
          %s256 = sand.u32 %s46, 1
          %s257 = scalar_lea.sflag [#allocation4], %s256
          %s258 = sand.u32 %s46, 1
          %s259 = smul.addr %s258, 4
          %s260 = scalar_lea.vmem [#allocation3], %s259
          %262 = vsyncadd %s257, 0
          %s263 = sadd.s32 %s30, %s29
          %s264 = smul.addr %s263, 4
          %s265 = scalar_lea.hbm %s0, %s264
          %s267 = sshll.u32 %s265, 4
          %s268 = int_to_ptr.hbm [resolvable:$true] %s267
          %s269 = sshll.u32 %s260, 4
          %s270 = int_to_ptr.vmem [resolvable:$true] %s269
          %272 = dma.hbm_to_vmem [thread:$0]  %s268, 64, %s270, %s257
        $region36: #{tpu_custom_call.1} parent=31 // pred_fallthru
          _
        // Predicated region
        $region37: #{tpu_custom_call.1} parent=31 // pred_check
          %p273 = pneg %p82
        $region38: #{tpu_custom_call.1} parent=31 // pred_check_branch
          %275 = sbr.rel (%p273) target = $region40
        $region39: #{tpu_custom_call.1} parent=31 // pred_region
          %s276 = sand.u32 %s22, 1
          %s277 = scalar_lea.sflag [#allocation7], %s276
          %s278 = sand.u32 %s72, 1
          %s279 = smul.addr %s278, 4
          %s280 = scalar_lea.vmem [#allocation6], %s279
          %282 = vsyncadd %s277, 0
          %s283 = smul.addr %s29, 4
          %s284 = scalar_lea.hbm %s1, %s283
          %s286 = sshll.u32 %s284, 4
          %s287 = int_to_ptr.hbm [resolvable:$true] %s286
          %s288 = sshll.u32 %s280, 4
          %s289 = int_to_ptr.vmem [resolvable:$true] %s288
          %291 = dma.hbm_to_vmem [thread:$0]  %s287, 64, %s289, %s277
        $region40: #{tpu_custom_call.1} parent=31 // pred_fallthru
          _
      $region32: #{tpu_custom_call.1} parent=5 // pred_fallthru
        _
      %p292 = scmp.le.s32.totalorder 1, %s22
      %p293 = scmp.lt.s32.totalorder %s22, 3
      %p294 = pnand %p292, %p293
      %p295 = pneg %p294
      // Predicated region
      $region41: #{tpu_custom_call.1} parent=5 // pred_check
        _
      $region42: #{tpu_custom_call.1} parent=5 // pred_check_branch
        %297 = sbr.rel (%p294) target = $region44
      $region43: #{tpu_custom_call.1} parent=5 // pred_region
        %s298 = ssub.s32 %s22, 1
        %s299 = sand.u32 %s49, 1
        %s300 = scalar_lea.sflag [#allocation4], %s299
        %s301 = sand.u32 %s49, 1
        %s302 = smul.addr %s301, 4
        %s303 = scalar_lea.vmem [#allocation3], %s302
        // Predicated region
        $region45: #{tpu_custom_call.1} parent=43 // pred_check
          %p304 = pneg %p62
        $region46: #{tpu_custom_call.1} parent=43 // pred_check_branch
          %306 = sbr.rel (%p304) target = $region48
        $region47: #{tpu_custom_call.1} parent=43 // pred_region
          %308 = dma.done %s300, 64
        $region48: #{tpu_custom_call.1} parent=43 // pred_fallthru
          _
        %s309 = sand.u32 %s27, 1
        %s310 = scalar_lea.sflag [#allocation7], %s309
        %s311 = sand.u32 %s75, 1
        %s312 = smul.addr %s311, 4
        %s313 = scalar_lea.vmem [#allocation6], %s312
        // Predicated region
        $region49: #{tpu_custom_call.1} parent=43 // pred_check
          %p314 = pneg %p88
        $region50: #{tpu_custom_call.1} parent=43 // pred_check_branch
          %316 = sbr.rel (%p314) target = $region52
        $region51: #{tpu_custom_call.1} parent=43 // pred_region
          %318 = dma.done %s310, 64
        $region52: #{tpu_custom_call.1} parent=43 // pred_fallthru
          _
        // Predicated region
        $region53: #{tpu_custom_call.1} parent=43 // pred_check
          %p319 = pneg %p109
        $region54: #{tpu_custom_call.1} parent=43 // pred_check_branch
          %321 = sbr.rel (%p319) target = $region56
        $region55: #{tpu_custom_call.1} parent=43 // pred_region
          %323 = dma.done [#allocation7], 128
        $region56: #{tpu_custom_call.1} parent=43 // pred_fallthru
          _
        // Predicated region
        $region57: #{tpu_custom_call.1} parent=43 // pred_check
          %p324 = pneg %p151
        $region58: #{tpu_custom_call.1} parent=43 // pred_check_branch
          %326 = sbr.rel (%p324) target = $region60
        $region59: #{tpu_custom_call.1} parent=43 // pred_region
          %328 = dma.done [#allocation10], 128
        $region60: #{tpu_custom_call.1} parent=43 // pred_fallthru
          _
        %s329 = sand.u32 %s49, 1
        %s330 = scalar_lea.sflag [#allocation4], %s329
        %s331 = sand.u32 %s49, 1
        %s332 = smul.addr %s331, 4
        %s333 = scalar_lea.vmem [#allocation3], %s332
        %p334 = pneg %p62
        %p335 = pneg %p59
        %s336 = sand.u32 %s27, 1
        %s337 = scalar_lea.sflag [#allocation7], %s336
        %s338 = sand.u32 %s75, 1
        %s339 = smul.addr %s338, 4
        %s340 = scalar_lea.vmem [#allocation6], %s339
        %p341 = pneg %p88
        %p342 = pneg %p85
        %p343 = pneg %p109
        %p344 = pneg %p106
        %p345 = pneg %p130
        %p346 = pneg %p127
        %p347 = pneg %p151
        %p348 = pneg %p148
        %p349 = pneg %p172
        %p350 = pneg %p169
        %p351 = pneg %p200
        %p352 = pneg %p197
        %s353 = sand.u32 %s187, 1
        %s354 = scalar_lea.sflag [#allocation5], %s353
        %s355 = sand.u32 %s187, 1
        %s356 = smul.addr %s355, 4
        %s357 = scalar_lea.vmem [#allocation11], %s356
        %p359 = scmp.eq.s32.totalorder %s32, 0
        // Predicated region
        $region61: #{tpu_custom_call.1} parent=43 // pred_check
          %p360 = pneg %p359
        $region62: #{tpu_custom_call.1} parent=43 // pred_check_branch
          %362 = sbr.rel (%p360) target = $region64
        $region63: #{tpu_custom_call.1} parent=43 // pred_region
          %v363 = vld [vmem:[%s313] sm:$0xf]
          %v364 = vld [vmem:[#allocation9] sm:$0xf]
          %v365 = vld [vmem:[#allocation9 + $0x4] sm:$0xf]
          %v366 = vld [vmem:[%s5] sm:$0x1]
          %v368 = vperm.slane %v366, 0
          %v372 = vunpack.c.l.b16 %v364
          %v373 = vunpack.c.l.b16 %v365
          %v374 = vpack.c.b16 %v373, %v372
          %vm376 = vcmask 130048
          %v378 = vsel %vm376, %v363, 0
          %380 = vmatpush.bf16.msra.mxu0 0
          %381 = vmatpush.bf16.msra.mxu0 0
          %382 = vmatpush.bf16.msra.mxu0 0
          %383 = vmatpush.bf16.msra.mxu0 0
          %384 = vmatpush.bf16.msra.mxu0 0
          %385 = vmatpush.bf16.msra.mxu0 0
          %386 = vmatpush.bf16.msra.mxu0 0
          %387 = vmatpush.bf16.msra.mxu0 %v374
          %388 = vmatmul.bf16.gmra.mxu0 %v378
          %v389 = vpop.f32.mrf.mxu0
          %v390 = vadd.f32 %v368, %v389
          %v391 = vpop.f32.mrf.mxu0
          %392 = vdwg.mxu0
          %v393 = vpack.c.bf16 %v390, %v390
          %vm394 = vcmask 257024
          %395 = vst.msk [vmem:[#allocation2] sm:$0xf] %vm394, %v393
        $region64: #{tpu_custom_call.1} parent=43 // pred_fallthru
          _
        %v396 = vld [vmem:[%s303] sm:$0xf]
        %v397 = vld [vmem:[#allocation8] sm:$0xf]
        %v398 = vld [vmem:[#allocation8 + $0x4] sm:$0xf]
        %v399 = vld [vmem:[%s3] sm:$0x1]
        %v401 = vperm.slane %v399, 0
        %v405 = vunpack.c.l.b16 %v397
        %v406 = vunpack.c.l.b16 %v398
        %v407 = vpack.c.b16 %v406, %v405
        %vm409 = vcmask 130048
        %v411 = vsel %vm409, %v396, 0
        %413 = vmatpush.bf16.msra.mxu0 0
        %414 = vmatpush.bf16.msra.mxu0 0
        %415 = vmatpush.bf16.msra.mxu0 0
        %416 = vmatpush.bf16.msra.mxu0 0
        %417 = vmatpush.bf16.msra.mxu0 0
        %418 = vmatpush.bf16.msra.mxu0 0
        %419 = vmatpush.bf16.msra.mxu0 0
        %420 = vmatpush.bf16.msra.mxu0 %v407
        %421 = vmatmul.bf16.gmra.mxu0 %v411
        %v422 = vpop.f32.mrf.mxu0
        %v423 = vadd.f32 %v401, %v422
        %v424 = vpop.f32.mrf.mxu0
        %425 = vdwg.mxu0
        %v426 = vpack.c.bf16 %v423, %v423
        %v427 = vld [vmem:[#allocation2] sm:$0xf]
        %vm428 = vcmask 261120
        %v430 = vsel %vm428, %v426, 0
        %v433 = vsel %vm428, %v427, 0
        %435 = vmatpush.bf16.xpose.msra.mxu0 0
        %436 = vmatpush.bf16.xpose.msra.mxu0 0
        %437 = vmatpush.bf16.xpose.msra.mxu0 0
        %438 = vmatpush.bf16.xpose.msra.mxu0 0
        %439 = vmatpush.bf16.xpose.msra.mxu0 0
        %440 = vmatpush.bf16.xpose.msra.mxu0 0
        %441 = vmatpush.bf16.xpose.msra.mxu0 0
        %442 = vmatpush.bf16.xpose.msra.mxu0 %v433
        %443 = vmatmul.bf16.gmra.mxu0 %v430
        %v444 = vpop.f32.mrf.mxu0
        %v445 = vadd.f32 0.0, %v444
        %v446 = vpop.f32.mrf.mxu0
        %447 = vdwg.mxu0
        %vm448 = vcmask 64512
        %v449 = vsel %vm448, %v445, -inf
        %450 = vmax.xlane.f32.xlu0 %v449
        %v451 = vpop.xlane.xlu0 %450
        %v452 = vsub.f32 %v445, %v451
        %v453 = vmul.f32 %v452, 1.442695
        %v454 = vpow.pop %v453
        %v455 = vsel %vm448, %v454, 0.0
        %456 = vadd.xlane.f32.xlu0 %v455
        %v457 = vpop.xlane.xlu0 %456
        %v458 = vrcp.pop %v457
        %v459 = vmul.f32 %v454, %v458
        %v460 = vpack.c.bf16 %v459, %v459
        %vm461 = vcmask 60416
        %462 = vst.msk [vmem:[%s357] sm:$0xf] %vm461, %v460
        %s463 = sand.u32 %s187, 1
        %s464 = scalar_lea.sflag [#allocation5], %s463
        %s465 = sand.u32 %s187, 1
        %s466 = smul.addr %s465, 4
        %s467 = scalar_lea.vmem [#allocation11], %s466
        // Predicated region
        $region65: #{tpu_custom_call.1} parent=43 // pred_check
          %p468 = pneg %p197
        $region66: #{tpu_custom_call.1} parent=43 // pred_check_branch
          %470 = sbr.rel (%p468) target = $region68
        $region67: #{tpu_custom_call.1} parent=43 // pred_region
          %472 = vsyncadd %s464, 0
          %s473 = sadd.s32 %s32, %s31
          %s474 = smul.addr %s473, 4
          %s475 = scalar_lea.hbm %s6, %s474
          %s477 = sshll.u32 %s467, 4
          %s478 = int_to_ptr.vmem [resolvable:$true] %s477
          %s479 = sshll.u32 %s475, 4
          %s480 = int_to_ptr.hbm [resolvable:$true] %s479
          %482 = dma.vmem_to_hbm [thread:$0]  %s478, 64, %s480, %s464
        $region68: #{tpu_custom_call.1} parent=43 // pred_fallthru
          _
      $region44: #{tpu_custom_call.1} parent=5 // pred_fallthru
        _
      %p483 = scmp.le.s32.totalorder 2, %s22
      // Predicated region
      $region69: #{tpu_custom_call.1} parent=5 // pred_check
        %p484 = pneg %p483
      $region70: #{tpu_custom_call.1} parent=5 // pred_check_branch
        %486 = sbr.rel (%p484) target = $region72
      $region71: #{tpu_custom_call.1} parent=5 // pred_region
        %s487 = ssub.s32 %s22, 2
        // Predicated region
        $region73: #{tpu_custom_call.1} parent=71 // pred_check
          %p488 = pneg %p203
        $region74: #{tpu_custom_call.1} parent=71 // pred_check_branch
          %490 = sbr.rel (%p488) target = $region76
        $region75: #{tpu_custom_call.1} parent=71 // pred_region
          %s491 = sand.u32 %s188, 1
          %s492 = scalar_lea.sflag [#allocation5], %s491
          %s493 = sand.u32 %s188, 1
          %s494 = smul.addr %s493, 4
          %s495 = scalar_lea.vmem [#allocation11], %s494
          %497 = dma.done %s492, 64
        $region76: #{tpu_custom_call.1} parent=71 // pred_fallthru
          _
      $region72: #{tpu_custom_call.1} parent=5 // pred_fallthru
        _
    $region6: #{tpu_custom_call.1} parent=1 // loop_footer
      %s26 = sadd.s32 1, %s22
    $region7: #{tpu_custom_call.1} parent=1 // loop_footer_branch
      %21 = sbr.rel target = $region3
    $region8: #{tpu_custom_call.1} parent=1 // loop_exit
      _
    %498 = vsyncpa [#allocation4], 1
    %s499 = scalar_lea.sflag [#allocation4], 1
    %500 = vsyncpa %s499, 1
    %501 = vsyncpa [#allocation7], 1
    %s502 = scalar_lea.sflag [#allocation7], 1
    %503 = vsyncpa %s502, 1
    %504 = vsyncpa [#allocation10], 1
    %505 = vsyncpa [#allocation5], 1
    %s506 = scalar_lea.sflag [#allocation5], 1
    %507 = vsyncpa %s506, 1

</llo_original>
